<compile_context>
chip_gen: v6e
topology: v6e:2x2x1
jax: 0.10.0
libtpu: 0.0.40
codegen_flags: <defaults>
</compile_context>

<pallas_src>
import functools

import jax
import jax.numpy as jnp
import numpy as np
from jax.experimental import pallas as pl
from jax.experimental.pallas import tpu as pltpu


def _dice_kernel(s_total, tiles_per_shard, need_mask,
                 out_ref, tgt_ref, inter_ref, pcnt_ref, tcnt_ref):
    sh = pl.program_id(1)   # spatial shard (parallel)
    ti = pl.program_id(2)   # spatial tile within the shard (reduction, last)

    # Init the resident int32 accumulators at the first tile of each
    # (sample, shard) reduction sweep.
    @pl.when(ti == 0)
    def _():
        inter_ref[...] = jnp.zeros_like(inter_ref)
        pcnt_ref[...] = jnp.zeros_like(pcnt_ref)
        tcnt_ref[...] = jnp.zeros_like(tcnt_ref)

    x = out_ref[0]                           # (C, TS) logits, native dtype
    tgt = tgt_ref[0].astype(jnp.int32)       # (1, TS) class ids
    C, TS = x.shape

    # (C, 1) sublane iota; broadcasts against (1, TS) rows expand lazily, so
    # no full (C, TS) int32 class-id buffer is built each step.
    class_col = jax.lax.broadcasted_iota(jnp.int32, (C, 1), 0)

    # argmax over channels, first-occurrence tie-break (matches torch.argmax).
    # NOTE: a NaN lane yields "no prediction" here, whereas torch would return
    # the NaN's index — only relevant if NaNs can occur in the logits.
    max_val = jnp.max(x, axis=0, keepdims=True)                    # (1, TS)
    is_max = x == max_val                                          # (C, TS)
    pred_idx = jnp.min(jnp.where(is_max, class_col, C),
                       axis=0, keepdims=True)                      # (1, TS)

    tgt_oh = class_col == tgt                                      # (C, TS)
    pred_oh = class_col == pred_idx                                # (C, TS)

    # Valid-lane mask: covers both the ragged spatial tail and fully-masked
    # "ghost" tiles of the last shard.  Only generated when needed, so aligned
    # shapes pay nothing.
    if need_mask:
        lane = jax.lax.broadcasted_iota(jnp.int32, (1, TS), 1)
        gt = sh * tiles_per_shard + ti
        valid = (gt * TS + lane) < s_total                         # (1, TS)
        tgt_oh = tgt_oh & valid
        pred_oh = pred_oh & valid

    # intersection[c] = #{s : tgt==c and pred==tgt}
    correct = pred_idx == tgt                                      # (1, TS)
    inter_ref[0, 0] += jnp.sum((tgt_oh & correct).astype(jnp.int32),
                               axis=-1, keepdims=True)             # (C, 1)
    pcnt_ref[0, 0] += jnp.sum(pred_oh.astype(jnp.int32),
                              axis=-1, keepdims=True)              # (C, 1)
    tcnt_ref[0, 0] += jnp.sum(tgt_oh.astype(jnp.int32),
                              axis=-1, keepdims=True)              # (C, 1)


def _choose_spatial_tile(s_len, n_ch, logit_bytes, tgt_bytes,
                         vmem_budget_bytes=8 * 1024 * 1024):
    """Pick a lane tile (multiple of 128).

    Budgets double-buffered inputs plus ~6x of live in-kernel per-tile
    temporaries (bool one-hots, the i32 argmax select, cast temps) and caps at
    2048 lanes: >=512 already saturates ~85% of HBM roofline, and the cap keeps
    the footprint comfortably inside v7x's 64 MiB physical VMEM.
    """
    per_lane_io = 2 * (n_ch * logit_bytes + tgt_bytes)     # 2 = double buffer
    per_lane_tmp = 6 * n_ch * max(logit_bytes, 4)          # live temporaries
    ts = vmem_budget_bytes // (per_lane_io + per_lane_tmp)
    ts = int(max(128, min(ts, 2048)))
    ts = (ts // 128) * 128
    s_up = ((s_len + 127) // 128) * 128
    return int(min(ts, s_up))


def dice_pallas(output, target, *, tile_s=None, num_shards=None):
    """Pallas Dice metric.

    Args:
      output: (N, C, *) float array of model logits/probabilities.
      target: (N, 1, *) integer array of class labels in [0, C).
      tile_s: optional spatial tile size (multiple of 128); auto if None.
      num_shards: optional number of spatial shards per sample (parallel axis);
        auto (2 when N == 1, else 1) if None.
    Returns:
      (C,) float32 per-class dice scores averaged over the batch.
    """
    output = jnp.asarray(output)
    target = jnp.asarray(target)
    N, C = output.shape[0], output.shape[1]
    S = int(np.prod(output.shape[2:]))

    # Keep f32 and bf16 in native dtype (bf16 fast path); everything else
    # (ints, f16, fp8) goes to f32.
    if output.dtype not in (jnp.float32, jnp.bfloat16):
        output = output.astype(jnp.float32)
    out_flat = output.reshape(N, C, S)
    # Precondition: labels in [0, C) (same contract as torch scatter_); int8
    # keeps the secondary DMA stream 4x smaller when C <= 127.
    tgt_dtype = jnp.int8 if C <= 127 else jnp.int32
    tgt_flat = target.reshape(N, 1, S).astype(tgt_dtype)

    logit_bytes = out_flat.dtype.itemsize
    tgt_bytes = tgt_flat.dtype.itemsize
    if tile_s is None:
        tile_s = _choose_spatial_tile(S, C, logit_bytes, tgt_bytes)
    n_tiles = pl.cdiv(S, tile_s)

    # Second parallel axis for v7x's two TensorCores when the batch axis alone
    # cannot feed them (N == 1).  Negligible overhead on single-TC chips.
    if num_shards is None:
        num_shards = 2 if (N == 1 and n_tiles >= 2) else 1
    num_shards = max(1, min(int(num_shards), n_tiles))
    tiles_per_shard = pl.cdiv(n_tiles, num_shards)
    need_mask = (num_shards * tiles_per_shard * tile_s) != S

    def spatial_map(n, h, t):
        # Clamp so ghost tiles of the last shard re-read a valid block; the
        # kernel masks their contribution to zero.
        gt = jnp.minimum(h * tiles_per_shard + t, n_tiles - 1)
        return (n, 0, gt)

    def count_map(n, h, t):
        return (n, h, 0, 0)       # constant along t -> resident accumulator

    kernel = functools.partial(_dice_kernel, S, tiles_per_shard, need_mask)

    count_shape = jax.ShapeDtypeStruct((N, num_shards, C, 1), jnp.int32)
    count_spec = pl.BlockSpec((1, 1, C, 1), count_map)

    cost = pl.CostEstimate(
        flops=10 * N * C * S,
        transcendentals=0,
        bytes_accessed=(N * C * S * logit_bytes + N * S * tgt_bytes
                        + 3 * N * num_shards * C * 4),
    )

    inter, pcnt, tcnt = pl.pallas_call(
        kernel,
        out_shape=(count_shape, count_shape, count_shape),
        grid_spec=pltpu.PrefetchScalarGridSpec(
            num_scalar_prefetch=0,
            grid=(N, num_shards, tiles_per_shard),
            in_specs=[
                pl.BlockSpec((1, C, tile_s), spatial_map),
                pl.BlockSpec((1, 1, tile_s), spatial_map),
            ],
            out_specs=[count_spec, count_spec, count_spec],
        ),
        compiler_params=pltpu.CompilerParams(
            dimension_semantics=("parallel", "parallel", "arbitrary"),
            vmem_limit_bytes=32 * 1024 * 1024,   # keep headroom on v7x (64 MiB)
        ),
        cost_estimate=cost,
    )(out_flat, tgt_flat)

    # Tiny finalize in the wrapper: sum shard partials, dice, batch mean.
    inter = jnp.sum(inter[..., 0], axis=1).astype(jnp.float32)   # (N, C)
    pcnt = jnp.sum(pcnt[..., 0], axis=1).astype(jnp.float32)
    tcnt = jnp.sum(tcnt[..., 0], axis=1).astype(jnp.float32)
    score = (2.0 * inter) / (pcnt + tcnt + 1e-10)
    return jnp.mean(score, axis=0)


def dice_ref(output, target):
    """Pure-JAX reference mirroring the PyTorch module."""
    C = output.shape[1]
    pred = jnp.argmax(output, axis=1)
    pred_oh = jax.nn.one_hot(pred, C, axis=1, dtype=jnp.float32)
    tgt_oh = jax.nn.one_hot(target[:, 0], C, axis=1, dtype=jnp.float32)
    dims = tuple(range(2, output.ndim))
    inter = 2.0 * jnp.sum(pred_oh * tgt_oh, axis=dims)
    union = jnp.sum(pred_oh, axis=dims) + jnp.sum(tgt_oh, axis=dims)
    return jnp.mean(inter / (union + 1e-10), axis=0)


if __name__ == "__main__":
    key = jax.random.PRNGKey(0)
    k1, k2, k3, k4, k5, k6 = jax.random.split(key, 6)

    # Case 1: aligned spatial size (S = 256), f32 logits, single tile, 1 shard.
    N, C, H, W = 2, 4, 16, 16
    output = jax.random.normal(k1, (N, C, H, W), dtype=jnp.float32)
    target = jax.random.randint(k2, (N, 1, H, W), 0, C, dtype=jnp.int32)
    score = jax.block_until_ready(dice_pallas(output, target))
    ref = jax.block_until_ready(dice_ref(output, target))
    np.testing.assert_allclose(np.asarray(score), np.asarray(ref),
                               rtol=1e-5, atol=1e-5)

    # Case 2: ragged spatial size (S = 169), bf16 native-compare path,
    # tile_s=128 -> two tiles with a partial tail: exercises cross-tile int32
    # accumulation and the valid-lane mask.
    N2, C2, H2, W2 = 2, 5, 13, 13
    output2 = jax.random.normal(k3, (N2, C2, H2, W2), dtype=jnp.bfloat16)
    target2 = jax.random.randint(k4, (N2, 1, H2, W2), 0, C2, dtype=jnp.int32)
    score2 = jax.block_until_ready(dice_pallas(output2, target2, tile_s=128))
    ref2 = jax.block_until_ready(dice_ref(output2, target2))
    np.testing.assert_allclose(np.asarray(score2), np.asarray(ref2),
                               rtol=1e-5, atol=1e-5)

    # Case 3: N == 1 -> 2 spatial shards (second parallel axis for v7x's two
    # TensorCores); S = 361, tile_s=128 -> 3 real tiles over 2 shards, so the
    # last shard has one fully-masked ghost tile plus a ragged tail.
    N3, C3, H3, W3 = 1, 4, 19, 19
    output3 = jax.random.normal(k5, (N3, C3, H3, W3), dtype=jnp.float32)
    target3 = jax.random.randint(k6, (N3, 1, H3, W3), 0, C3, dtype=jnp.int32)
    score3 = jax.block_until_ready(dice_pallas(output3, target3, tile_s=128))
    ref3 = jax.block_until_ready(dice_ref(output3, target3))
    np.testing.assert_allclose(np.asarray(score3), np.asarray(ref3),
                               rtol=1e-5, atol=1e-5)

    print("KERNEL_OK")
</pallas_src>

<mosaic_0001>
module attributes {stable_mosaic.version = 11 : i64} {
  func.func @_dice_kernel(%arg0: i32, %arg1: i32, %arg2: i32, %arg3: memref<1x4x256xf32, #tpu.memory_space<vmem>>, %arg4: memref<1x1x256xi8, #tpu.memory_space<vmem>>, %arg5: memref<1x1x4x1xi32, #tpu.memory_space<vmem>>, %arg6: memref<1x1x4x1xi32, #tpu.memory_space<vmem>>, %arg7: memref<1x1x4x1xi32, #tpu.memory_space<vmem>>) attributes {dimension_semantics = [#tpu.dimension_semantics<parallel>, #tpu.dimension_semantics<parallel>, #tpu.dimension_semantics<arbitrary>], iteration_bounds = array<i64: 2, 1, 1>, scalar_prefetch = 0 : i64, scratch_operands = 0 : i64, tpu.core_type = #tpu.core_type<tc>, window_params = [{transform_indices = @transform_0, window_bounds = array<i64: 1, 4, 256>}, {transform_indices = @transform_1, window_bounds = array<i64: 1, 1, 256>}, {transform_indices = @transform_2, window_bounds = array<i64: 1, 1, 4, 1>}, {transform_indices = @transform_3, window_bounds = array<i64: 1, 1, 4, 1>}, {transform_indices = @transform_4, window_bounds = array<i64: 1, 1, 4, 1>}]} {
    %c0_i32 = arith.constant 0 : i32
    %0 = arith.cmpi eq, %arg2, %c0_i32 : i32
    %1 = arith.extui %0 : i1 to i32
    %c0_i32_0 = arith.constant 0 : i32
    %2 = arith.cmpi ne, %1, %c0_i32_0 : i32
    scf.if %2 {
      %c0_i32_34 = arith.constant 0 : i32
      %55 = vector.broadcast %c0_i32_34 : i32 to vector<1x1x4x1xi32>
      %c0_35 = arith.constant 0 : index
      %c0_36 = arith.constant 0 : index
      %c0_37 = arith.constant 0 : index
      %c0_38 = arith.constant 0 : index
      %56 = vector.load %arg5[%c0_35, %c0_36, %c0_37, %c0_38] : memref<1x1x4x1xi32, #tpu.memory_space<vmem>>, vector<1x1x4x1xi32>
      tpu.vector_store %arg5[%c0_35, %c0_36, %c0_37, %c0_38], %55 {strides = array<i32>} : memref<1x1x4x1xi32, #tpu.memory_space<vmem>>, vector<1x1x4x1xi32>,
      %c0_i32_39 = arith.constant 0 : i32
      %57 = vector.broadcast %c0_i32_39 : i32 to vector<1x1x4x1xi32>
      %c0_40 = arith.constant 0 : index
      %c0_41 = arith.constant 0 : index
      %c0_42 = arith.constant 0 : index
      %c0_43 = arith.constant 0 : index
      %58 = vector.load %arg6[%c0_40, %c0_41, %c0_42, %c0_43] : memref<1x1x4x1xi32, #tpu.memory_space<vmem>>, vector<1x1x4x1xi32>
      tpu.vector_store %arg6[%c0_40, %c0_41, %c0_42, %c0_43], %57 {strides = array<i32>} : memref<1x1x4x1xi32, #tpu.memory_space<vmem>>, vector<1x1x4x1xi32>,
      %c0_i32_44 = arith.constant 0 : i32
      %59 = vector.broadcast %c0_i32_44 : i32 to vector<1x1x4x1xi32>
      %c0_45 = arith.constant 0 : index
      %c0_46 = arith.constant 0 : index
      %c0_47 = arith.constant 0 : index
      %c0_48 = arith.constant 0 : index
      %60 = vector.load %arg7[%c0_45, %c0_46, %c0_47, %c0_48] : memref<1x1x4x1xi32, #tpu.memory_space<vmem>>, vector<1x1x4x1xi32>
      tpu.vector_store %arg7[%c0_45, %c0_46, %c0_47, %c0_48], %59 {strides = array<i32>} : memref<1x1x4x1xi32, #tpu.memory_space<vmem>>, vector<1x1x4x1xi32>,
    } else {
    }
    %c0 = arith.constant 0 : index
    %c0_1 = arith.constant 0 : index
    %c0_2 = arith.constant 0 : index
    %3 = vector.load %arg3[%c0, %c0_1, %c0_2] : memref<1x4x256xf32, #tpu.memory_space<vmem>>, vector<1x4x256xf32>
    %4 = vector.shape_cast %3 : vector<1x4x256xf32> to vector<4x256xf32>
    %c0_3 = arith.constant 0 : index
    %c0_4 = arith.constant 0 : index
    %c0_5 = arith.constant 0 : index
    %5 = vector.load %arg4[%c0_3, %c0_4, %c0_5] : memref<1x1x256xi8, #tpu.memory_space<vmem>>, vector<1x1x256xi8>
    %6 = vector.shape_cast %5 : vector<1x1x256xi8> to vector<1x256xi8>
    %7 = arith.extsi %6 : vector<1x256xi8> to vector<1x256xi32>
    %8 = tpu.iota {dimensions = array<i32: 0>} : vector<4x1xi32>
    %cst = arith.constant dense<0xFF800000> : vector<256xf32>
    %9 = vector.multi_reduction <maximumf>, %4, %cst [0] : vector<4x256xf32> to vector<256xf32>
    %10 = vector.shape_cast %9 : vector<256xf32> to vector<1x256xf32>
    %11 = vector.broadcast %10 : vector<1x256xf32> to vector<4x256xf32>
    %12 = arith.cmpf oeq, %4, %11 : vector<4x256xf32>
    %c4_i32 = arith.constant 4 : i32
    %13 = vector.shape_cast %8 : vector<4x1xi32> to vector<4x1xi32>
    %14 = vector.broadcast %13 : vector<4x1xi32> to vector<4x256xi32>
    %15 = vector.broadcast %c4_i32 : i32 to vector<4x256xi32>
    %16 = arith.select %12, %14, %15 : vector<4x256xi1>, vector<4x256xi32>
    %cst_6 = arith.constant dense<2147483647> : vector<256xi32>
    %17 = vector.multi_reduction <minsi>, %16, %cst_6 [0] : vector<4x256xi32> to vector<256xi32>
    %18 = vector.shape_cast %17 : vector<256xi32> to vector<1x256xi32>
    %19 = vector.broadcast %8 : vector<4x1xi32> to vector<4x256xi32>
    %20 = vector.broadcast %7 : vector<1x256xi32> to vector<4x256xi32>
    %21 = arith.cmpi eq, %19, %20 : vector<4x256xi32>
    %22 = vector.broadcast %8 : vector<4x1xi32> to vector<4x256xi32>
    %23 = vector.broadcast %18 : vector<1x256xi32> to vector<4x256xi32>
    %24 = arith.cmpi eq, %22, %23 : vector<4x256xi32>
    %25 = arith.cmpi eq, %18, %7 : vector<1x256xi32>
    %c0_7 = arith.constant 0 : index
    %c0_8 = arith.constant 0 : index
    %c0_9 = arith.constant 0 : index
    %c0_10 = arith.constant 0 : index
    %26 = vector.load %arg5[%c0_7, %c0_8, %c0_9, %c0_10] : memref<1x1x4x1xi32, #tpu.memory_space<vmem>>, vector<1x1x4x1xi32>
    %27 = vector.shape_cast %26 : vector<1x1x4x1xi32> to vector<4x1xi32>
    %28 = vector.broadcast %25 : vector<1x256xi1> to vector<4x256xi1>
    %29 = arith.andi %21, %28 : vector<4x256xi1>
    %30 = arith.extui %29 : vector<4x256xi1> to vector<4x256xi32>
    %cst_11 = arith.constant dense<0> : vector<4xi32>
    %31 = vector.multi_reduction <add>, %30, %cst_11 [1] : vector<4x256xi32> to vector<4xi32>
    %32 = vector.shape_cast %31 : vector<4xi32> to vector<4x1xi32>
    %33 = arith.addi %27, %32 : vector<4x1xi32>
    %c0_12 = arith.constant 0 : index
    %c0_13 = arith.constant 0 : index
    %c0_14 = arith.constant 0 : index
    %c0_15 = arith.constant 0 : index
    %34 = vector.load %arg5[%c0_12, %c0_13, %c0_14, %c0_15] : memref<1x1x4x1xi32, #tpu.memory_space<vmem>>, vector<1x1x4x1xi32>
    %35 = vector.shape_cast %34 : vector<1x1x4x1xi32> to vector<4x1xi32>
    %36 = vector.shape_cast %33 : vector<4x1xi32> to vector<1x1x4x1xi32>
    tpu.vector_store %arg5[%c0_12, %c0_13, %c0_14, %c0_15], %36 {strides = array<i32>} : memref<1x1x4x1xi32, #tpu.memory_space<vmem>>, vector<1x1x4x1xi32>,
    %c0_16 = arith.constant 0 : index
    %c0_17 = arith.constant 0 : index
    %c0_18 = arith.constant 0 : index
    %c0_19 = arith.constant 0 : index
    %37 = vector.load %arg6[%c0_16, %c0_17, %c0_18, %c0_19] : memref<1x1x4x1xi32, #tpu.memory_space<vmem>>, vector<1x1x4x1xi32>
    %38 = vector.shape_cast %37 : vector<1x1x4x1xi32> to vector<4x1xi32>
    %39 = arith.extui %24 : vector<4x256xi1> to vector<4x256xi32>
    %cst_20 = arith.constant dense<0> : vector<4xi32>
    %40 = vector.multi_reduction <add>, %39, %cst_20 [1] : vector<4x256xi32> to vector<4xi32>
    %41 = vector.shape_cast %40 : vector<4xi32> to vector<4x1xi32>
    %42 = arith.addi %38, %41 : vector<4x1xi32>
    %c0_21 = arith.constant 0 : index
    %c0_22 = arith.constant 0 : index
    %c0_23 = arith.constant 0 : index
    %c0_24 = arith.constant 0 : index
    %43 = vector.load %arg6[%c0_21, %c0_22, %c0_23, %c0_24] : memref<1x1x4x1xi32, #tpu.memory_space<vmem>>, vector<1x1x4x1xi32>
    %44 = vector.shape_cast %43 : vector<1x1x4x1xi32> to vector<4x1xi32>
    %45 = vector.shape_cast %42 : vector<4x1xi32> to vector<1x1x4x1xi32>
    tpu.vector_store %arg6[%c0_21, %c0_22, %c0_23, %c0_24], %45 {strides = array<i32>} : memref<1x1x4x1xi32, #tpu.memory_space<vmem>>, vector<1x1x4x1xi32>,
    %c0_25 = arith.constant 0 : index
    %c0_26 = arith.constant 0 : index
    %c0_27 = arith.constant 0 : index
    %c0_28 = arith.constant 0 : index
    %46 = vector.load %arg7[%c0_25, %c0_26, %c0_27, %c0_28] : memref<1x1x4x1xi32, #tpu.memory_space<vmem>>, vector<1x1x4x1xi32>
    %47 = vector.shape_cast %46 : vector<1x1x4x1xi32> to vector<4x1xi32>
    %48 = arith.extui %21 : vector<4x256xi1> to vector<4x256xi32>
    %cst_29 = arith.constant dense<0> : vector<4xi32>
    %49 = vector.multi_reduction <add>, %48, %cst_29 [1] : vector<4x256xi32> to vector<4xi32>
    %50 = vector.shape_cast %49 : vector<4xi32> to vector<4x1xi32>
    %51 = arith.addi %47, %50 : vector<4x1xi32>
    %c0_30 = arith.constant 0 : index
    %c0_31 = arith.constant 0 : index
    %c0_32 = arith.constant 0 : index
    %c0_33 = arith.constant 0 : index
    %52 = vector.load %arg7[%c0_30, %c0_31, %c0_32, %c0_33] : memref<1x1x4x1xi32, #tpu.memory_space<vmem>>, vector<1x1x4x1xi32>
    %53 = vector.shape_cast %52 : vector<1x1x4x1xi32> to vector<4x1xi32>
    %54 = vector.shape_cast %51 : vector<4x1xi32> to vector<1x1x4x1xi32>
    tpu.vector_store %arg7[%c0_30, %c0_31, %c0_32, %c0_33], %54 {strides = array<i32>} : memref<1x1x4x1xi32, #tpu.memory_space<vmem>>, vector<1x1x4x1xi32>,
    return
  }
  func.func @transform_0(%arg0: i32, %arg1: i32, %arg2: i32) -> (i32, i32, i32) {
    %c1_i32 = arith.constant 1 : i32
    %0 = arith.muli %arg1, %c1_i32 : i32
    %1 = arith.addi %0, %arg2 : i32
    %c0_i32 = arith.constant 0 : i32
    %2 = arith.minsi %1, %c0_i32 : i32
    %c0_i32_0 = arith.constant 0 : i32
    %c0_i32_1 = arith.constant 0 : i32
    return %arg0, %c0_i32_0, %2 : i32, i32, i32
  }
  func.func @transform_1(%arg0: i32, %arg1: i32, %arg2: i32) -> (i32, i32, i32) {
    %c1_i32 = arith.constant 1 : i32
    %0 = arith.muli %arg1, %c1_i32 : i32
    %1 = arith.addi %0, %arg2 : i32
    %c0_i32 = arith.constant 0 : i32
    %2 = arith.minsi %1, %c0_i32 : i32
    %c0_i32_0 = arith.constant 0 : i32
    %c0_i32_1 = arith.constant 0 : i32
    return %arg0, %c0_i32_0, %2 : i32, i32, i32
  }
  func.func @transform_2(%arg0: i32, %arg1: i32, %arg2: i32) -> (i32, i32, i32, i32) {
    %c0_i32 = arith.constant 0 : i32
    %c0_i32_0 = arith.constant 0 : i32
    %c0_i32_1 = arith.constant 0 : i32
    return %arg0, %arg1, %c0_i32, %c0_i32_0 : i32, i32, i32, i32
  }
  func.func @transform_3(%arg0: i32, %arg1: i32, %arg2: i32) -> (i32, i32, i32, i32) {
    %c0_i32 = arith.constant 0 : i32
    %c0_i32_0 = arith.constant 0 : i32
    %c0_i32_1 = arith.constant 0 : i32
    return %arg0, %arg1, %c0_i32, %c0_i32_0 : i32, i32, i32, i32
  }
  func.func @transform_4(%arg0: i32, %arg1: i32, %arg2: i32) -> (i32, i32, i32, i32) {
    %c0_i32 = arith.constant 0 : i32
    %c0_i32_0 = arith.constant 0 : i32
    %c0_i32_1 = arith.constant 0 : i32
    return %arg0, %arg1, %c0_i32, %c0_i32_0 : i32, i32, i32, i32
  }
}

</mosaic_0001>

<llo_original>
// kernel: tpu_custom_call.1
$region0: #{tpu_custom_call.1}
  #allocation0 [shape = 'u32[]', space=smem, size = 0x4, offset = 0x4, fixed_abs, tag = 'smem constant byte address 0x4 - core index']
  #allocation1 [shape = 'u32[144,128]{1,0:T(1,128)}', space=vmem, size = 0x12000, scoped, tag = 'internal scratch']
  %s0 = inlined_call_operand.hbm [shape: f32[2,4,256], index: 0, kind: input, shape index: {}]
  %s1 = inlined_call_operand.vmem [shape: s8[2,1,256], index: 1, kind: input, shape index: {}]
  %s2 = inlined_call_operand.vmem [shape: s32[2,1,4,1], index: 2, kind: output, shape index: {0}]
  %s3 = inlined_call_operand.vmem [shape: s32[2,1,4,1], index: 3, kind: output, shape index: {1}]
  %s4 = inlined_call_operand.vmem [shape: s32[2,1,4,1], index: 4, kind: output, shape index: {2}]
  %5 = xla_tuple %s2, %s3, %s4
  %s6 = sld [smem:[#allocation0]]
  $region65: #{tpu_custom_call.1} parent=0
    _
  %s8 = ssub.s32 1, %s6
  %s9 = scalar_select 0, %s8, %s6
  $region1: #{tpu_custom_call.1} parent=0
    #allocation2 [shape = 'u8[8192]{0}', space=vmem, size = 0x2000, scoped, tag = 'input window, operand 0']
    #allocation3 [shape = 's32[2]{0}', space=sflag, size = 0x8, scoped, tag = 'scoped memory for tpu_custom_call.1']
    %10 = vsyncpa [#allocation3], 0
    %s11 = scalar_lea.sflag [#allocation3], 1
    %12 = vsyncpa %s11, 0
    loop: start=0, step=1, limit=4
    $region2: #{tpu_custom_call.1} parent=1 // loop_pre_header
      _
    $region3: #{tpu_custom_call.1} parent=1 // loop_header
      %s14 = sphi 0, %s18
      %p15 = scmp.ge.s32.totalorder %s14, 4
      %s21 = sphi 0, %s40
      %s22 = sphi 0, %s36
      %s23 = sphi 0, %s32
      %s24 = sphi 0, %s21
      %s25 = sphi 0, %s22
      %s26 = sphi 0, %s23
      %s27 = sphi 0, %s24
      %s28 = sphi 0, %s25
      %s29 = sphi 0, %s26
      %s51 = sphi 0, %s53
      %s54 = sphi 0, %s51
      %s55 = sphi 0, %s54
      %s71 = sphi 0, %s55
      %s85 = sphi 0, %s87
      %s88 = sphi 0, %s85
      %s89 = sphi 0, %s88
      %s105 = sphi 0, %s89
      %s113 = sphi 0, %s115
      %s116 = sphi 0, %s113
      %s117 = sphi 0, %s116
      %s133 = sphi 0, %s117
      %s141 = sphi 0, %s143
      %s144 = sphi 0, %s141
      %s145 = sphi 0, %s144
      %s161 = sphi 0, %s145
      %s169 = sphi 0, %s171
      %s172 = sphi 0, %s169
      %s173 = sphi 0, %s172
      %s189 = sphi 0, %s173
    $region4: #{tpu_custom_call.1} parent=1 // loop_header_branch
      %17 = sbr.rel (%p15) target = $region8
    $region5: #{tpu_custom_call.1} parent=1 // loop_body
      %s19 = ssub.s32 %s14, 1
      %s20 = ssub.s32 %s14, 2
      %s30 = sadd.s32 1, %s23
      %p31 = scmp.ge.s32.totalorder %s30, 1
      %s32 = scalar_select %p31, 0, %s30
      %s33 = sadd.s32 1, %s22
      %s34 = scalar_select %p31, %s33, %s22
      %p35 = scmp.ge.s32.totalorder %s34, 1
      %s36 = scalar_select %p35, 0, %s34
      %s37 = sadd.s32 1, %s21
      %s38 = scalar_select %p35, %s37, %s21
      %p39 = scmp.ge.s32.totalorder %s38, 2
      %s40 = scalar_select %p39, 0, %s38
      %s41 = sadd.s32 %s22, %s23
      %p42 = scmp.lt.s32.totalorder %s41, 0
      %s43 = scalar_select %p42, %s41, 0
      %s44 = sadd.s32 %s36, %s32
      %p45 = scmp.lt.s32.totalorder %s44, 0
      %s46 = scalar_select %p45, %s44, 0
      %s47 = ssub.s32 %s21, %s40
      %s48 = ssub.s32 %s43, %s46
      %s49 = sor.u32 %s47, %s48
      %p50 = scmp.eq.s32.totalorder %s49, 0
      %s52 = sadd.s32 %s51, 1
      %s53 = scalar_select %p50, %s51, %s52
      %p56 = pneg %p50
      %p57 = scmp.eq.s32.totalorder %s14, 1
      %p58 = por %p56, %p57
      %p59 = scmp.ne.s32.totalorder %s51, %s54
      %p60 = scmp.eq.s32.totalorder %s14, 0
      %p61 = por %p59, %p60
      %p62 = scmp.ne.s32.totalorder %s51, %s54
      %p63 = scmp.eq.s32.totalorder %s19, 1
      %p64 = por %p62, %p63
      %p65 = scmp.ne.s32.totalorder %s54, %s55
      %p66 = scmp.eq.s32.totalorder %s19, 0
      %p67 = por %p65, %p66
      %p68 = scmp.ne.s32.totalorder %s54, %s55
      %p69 = scmp.eq.s32.totalorder %s20, 1
      %p70 = por %p68, %p69
      %p72 = scmp.ne.s32.totalorder %s55, %s71
      %p73 = scmp.eq.s32.totalorder %s20, 0
      %p74 = por %p72, %p73
      %s75 = sadd.s32 %s22, %s23
      %p76 = scmp.lt.s32.totalorder %s75, 0
      %s77 = scalar_select %p76, %s75, 0
      %s78 = sadd.s32 %s36, %s32
      %p79 = scmp.lt.s32.totalorder %s78, 0
      %s80 = scalar_select %p79, %s78, 0
      %s81 = ssub.s32 %s21, %s40
      %s82 = ssub.s32 %s77, %s80
      %s83 = sor.u32 %s81, %s82
      %p84 = scmp.eq.s32.totalorder %s83, 0
      %s86 = sadd.s32 %s85, 1
      %s87 = scalar_select %p84, %s85, %s86
      %p90 = pneg %p84
      %p91 = scmp.eq.s32.totalorder %s14, 1
      %p92 = por %p90, %p91
      %p93 = scmp.ne.s32.totalorder %s85, %s88
      %p94 = scmp.eq.s32.totalorder %s14, 0
      %p95 = por %p93, %p94
      %p96 = scmp.ne.s32.totalorder %s85, %s88
      %p97 = scmp.eq.s32.totalorder %s19, 1
      %p98 = por %p96, %p97
      %p99 = scmp.ne.s32.totalorder %s88, %s89
      %p100 = scmp.eq.s32.totalorder %s19, 0
      %p101 = por %p99, %p100
      %p102 = scmp.ne.s32.totalorder %s88, %s89
      %p103 = scmp.eq.s32.totalorder %s20, 1
      %p104 = por %p102, %p103
      %p106 = scmp.ne.s32.totalorder %s89, %s105
      %p107 = scmp.eq.s32.totalorder %s20, 0
      %p108 = por %p106, %p107
      %s109 = ssub.s32 %s21, %s40
      %s110 = ssub.s32 %s22, %s36
      %s111 = sor.u32 %s109, %s110
      %p112 = scmp.eq.s32.totalorder %s111, 0
      %s114 = sadd.s32 %s113, 1
      %s115 = scalar_select %p112, %s113, %s114
      %p118 = pneg %p112
      %p119 = scmp.eq.s32.totalorder %s14, 1
      %p120 = por %p118, %p119
      %p121 = scmp.ne.s32.totalorder %s113, %s116
      %p122 = scmp.eq.s32.totalorder %s14, 0
      %p123 = por %p121, %p122
      %p124 = scmp.ne.s32.totalorder %s113, %s116
      %p125 = scmp.eq.s32.totalorder %s19, 1
      %p126 = por %p124, %p125
      %p127 = scmp.ne.s32.totalorder %s116, %s117
      %p128 = scmp.eq.s32.totalorder %s19, 0
      %p129 = por %p127, %p128
      %p130 = scmp.ne.s32.totalorder %s116, %s117
      %p131 = scmp.eq.s32.totalorder %s20, 1
      %p132 = por %p130, %p131
      %p134 = scmp.ne.s32.totalorder %s117, %s133
      %p135 = scmp.eq.s32.totalorder %s20, 0
      %p136 = por %p134, %p135
      %s137 = ssub.s32 %s21, %s40
      %s138 = ssub.s32 %s22, %s36
      %s139 = sor.u32 %s137, %s138
      %p140 = scmp.eq.s32.totalorder %s139, 0
      %s142 = sadd.s32 %s141, 1
      %s143 = scalar_select %p140, %s141, %s142
      %p146 = pneg %p140
      %p147 = scmp.eq.s32.totalorder %s14, 1
      %p148 = por %p146, %p147
      %p149 = scmp.ne.s32.totalorder %s141, %s144
      %p150 = scmp.eq.s32.totalorder %s14, 0
      %p151 = por %p149, %p150
      %p152 = scmp.ne.s32.totalorder %s141, %s144
      %p153 = scmp.eq.s32.totalorder %s19, 1
      %p154 = por %p152, %p153
      %p155 = scmp.ne.s32.totalorder %s144, %s145
      %p156 = scmp.eq.s32.totalorder %s19, 0
      %p157 = por %p155, %p156
      %p158 = scmp.ne.s32.totalorder %s144, %s145
      %p159 = scmp.eq.s32.totalorder %s20, 1
      %p160 = por %p158, %p159
      %p162 = scmp.ne.s32.totalorder %s145, %s161
      %p163 = scmp.eq.s32.totalorder %s20, 0
      %p164 = por %p162, %p163
      %s165 = ssub.s32 %s21, %s40
      %s166 = ssub.s32 %s22, %s36
      %s167 = sor.u32 %s165, %s166
      %p168 = scmp.eq.s32.totalorder %s167, 0
      %s170 = sadd.s32 %s169, 1
      %s171 = scalar_select %p168, %s169, %s170
      %p174 = pneg %p168
      %p175 = scmp.eq.s32.totalorder %s14, 1
      %p176 = por %p174, %p175
      %p177 = scmp.ne.s32.totalorder %s169, %s172
      %p178 = scmp.eq.s32.totalorder %s14, 0
      %p179 = por %p177, %p178
      %p180 = scmp.ne.s32.totalorder %s169, %s172
      %p181 = scmp.eq.s32.totalorder %s19, 1
      %p182 = por %p180, %p181
      %p183 = scmp.ne.s32.totalorder %s172, %s173
      %p184 = scmp.eq.s32.totalorder %s19, 0
      %p185 = por %p183, %p184
      %p186 = scmp.ne.s32.totalorder %s172, %s173
      %p187 = scmp.eq.s32.totalorder %s20, 1
      %p188 = por %p186, %p187
      %p190 = scmp.ne.s32.totalorder %s173, %s189
      %p191 = scmp.eq.s32.totalorder %s20, 0
      %p192 = por %p190, %p191
      %p193 = scmp.le.s32.totalorder 1, %s14
      %p194 = scmp.lt.s32.totalorder %s14, 3
      %p195 = pnand %p193, %p194
      %p196 = pneg %p195
      // Predicated region
      $region9: #{tpu_custom_call.1} parent=5 // pred_check
        _
      $region10: #{tpu_custom_call.1} parent=5 // pred_check_branch
        %198 = sbr.rel (%p195) target = $region12
      $region11: #{tpu_custom_call.1} parent=5 // pred_region
        %s199 = ssub.s32 %s14, 1
      $region12: #{tpu_custom_call.1} parent=5 // pred_fallthru
        _
      %p200 = scmp.lt.s32.totalorder %s14, 2
      // Predicated region
      $region13: #{tpu_custom_call.1} parent=5 // pred_check
        %p201 = pneg %p200
      $region14: #{tpu_custom_call.1} parent=5 // pred_check_branch
        %203 = sbr.rel (%p201) target = $region16
      $region15: #{tpu_custom_call.1} parent=5 // pred_region
        // Predicated region
        $region17: #{tpu_custom_call.1} parent=15 // pred_check
          %p204 = pneg %p61
        $region18: #{tpu_custom_call.1} parent=15 // pred_check_branch
          %206 = sbr.rel (%p204) target = $region20
        $region19: #{tpu_custom_call.1} parent=15 // pred_region
          %s207 = sand.u32 %s51, 1
          %s208 = scalar_lea.sflag [#allocation3], %s207
          %s209 = sand.u32 %s51, 1
          %s210 = smul.addr %s209, 8
          %s211 = scalar_lea.vmem [#allocation2], %s210
          %s212 = sadd.s32 %s22, %s23
          %p213 = scmp.lt.s32.totalorder %s212, 0
          %s214 = scalar_select %p213, %s212, 0
          %s215 = smul.u32 2, %s214
          %s217 = ssub.s32 128, 128
          %218 = vsyncadd %s208, %s217
          %s219 = smul.addr %s21, 2
          %s220 = sadd.s32 %s215, %s219
          %s221 = smul.addr %s220, 64
          %s222 = scalar_lea.hbm %s0, %s221
          %s224 = sshll.u32 %s211, 4
          %s225 = int_to_ptr.vmem [resolvable:$true] %s224
          %227 = dma.hbm_to_vmem [thread:$0]  %s222, 128, %s225, %s208
        $region20: #{tpu_custom_call.1} parent=15 // pred_fallthru
          _
        // Predicated region
        $region21: #{tpu_custom_call.1} parent=15 // pred_check
          %p228 = pneg %p95
        $region22: #{tpu_custom_call.1} parent=15 // pred_check_branch
          %230 = sbr.rel (%p228) target = $region24
        $region23: #{tpu_custom_call.1} parent=15 // pred_region
          %s231 = sadd.s32 %s22, %s23
          %p232 = scmp.lt.s32.totalorder %s231, 0
          %s233 = scalar_select %p232, %s231, 0
          %s234 = smul.u32 2, %s233
          %p235 = scmp.lt.s32.totalorder %s21, 1
          %s236 = scalar_select %p235, %s21, 1
          %p237 = scmp.lt.s32.totalorder %s234, 1
          %s238 = scalar_select %p237, %s234, 1
          %s239 = smul.addr %s236, 2
          %s240 = sadd.s32 %s238, %s239
          %s241 = scalar_lea.vmem %s1, %s240
          %s242 = sadd.s32 %s22, %s23
          %p243 = scmp.lt.s32.totalorder %s242, 0
          %s244 = scalar_select %p243, %s242, 0
          %s245 = smul.u32 2, %s244
        $region24: #{tpu_custom_call.1} parent=15 // pred_fallthru
          _
      $region16: #{tpu_custom_call.1} parent=5 // pred_fallthru
        _
      %p246 = scmp.le.s32.totalorder 1, %s14
      %p247 = scmp.lt.s32.totalorder %s14, 3
      %p248 = pnand %p246, %p247
      %p249 = pneg %p248
      // Predicated region
      $region25: #{tpu_custom_call.1} parent=5 // pred_check
        _
      $region26: #{tpu_custom_call.1} parent=5 // pred_check_branch
        %251 = sbr.rel (%p248) target = $region28
      $region27: #{tpu_custom_call.1} parent=5 // pred_region
        %s252 = ssub.s32 %s14, 1
        %s253 = sand.u32 %s54, 1
        %s254 = scalar_lea.sflag [#allocation3], %s253
        %s255 = sand.u32 %s54, 1
        %s256 = smul.addr %s255, 8
        %s257 = scalar_lea.vmem [#allocation2], %s256
        // Predicated region
        $region29: #{tpu_custom_call.1} parent=27 // pred_check
          %p258 = pneg %p67
        $region30: #{tpu_custom_call.1} parent=27 // pred_check_branch
          %260 = sbr.rel (%p258) target = $region32
        $region31: #{tpu_custom_call.1} parent=27 // pred_region
          %261 = dma.done %s254, 128
        $region32: #{tpu_custom_call.1} parent=27 // pred_fallthru
          _
        %s262 = sand.u32 %s54, 1
        %s263 = scalar_lea.sflag [#allocation3], %s262
        %s264 = sand.u32 %s54, 1
        %s265 = smul.addr %s264, 8
        %s266 = scalar_lea.vmem [#allocation2], %s265
        %p267 = pneg %p67
        %p268 = pneg %p64
        %s269 = sadd.s32 %s25, %s26
        %p270 = scmp.lt.s32.totalorder %s269, 0
        %s271 = scalar_select %p270, %s269, 0
        %s272 = smul.u32 2, %s271
        %p273 = scmp.lt.s32.totalorder %s24, 1
        %s274 = scalar_select %p273, %s24, 1
        %p275 = scmp.lt.s32.totalorder %s272, 1
        %s276 = scalar_select %p275, %s272, 1
        %s277 = smul.addr %s274, 2
        %s278 = sadd.s32 %s276, %s277
        %s279 = scalar_lea.vmem %s1, %s278
        %p280 = pneg %p101
        %p281 = pneg %p98
        %p282 = pneg %p129
        %p283 = pneg %p126
        %p284 = scmp.lt.s32.totalorder %s24, 1
        %s285 = scalar_select %p284, %s24, 1
        %p286 = scmp.lt.s32.totalorder %s25, 0
        %s287 = scalar_select %p286, %s25, 0
        %s288 = sadd.s32 %s287, %s285
        %s289 = smul.addr %s288, 4
        %s290 = scalar_lea.vmem %s2, %s289
        %p291 = pneg %p157
        %p292 = pneg %p154
        %p293 = scmp.lt.s32.totalorder %s24, 1
        %s294 = scalar_select %p293, %s24, 1
        %p295 = scmp.lt.s32.totalorder %s25, 0
        %s296 = scalar_select %p295, %s25, 0
        %s297 = sadd.s32 %s296, %s294
        %s298 = smul.addr %s297, 4
        %s299 = scalar_lea.vmem %s3, %s298
        %p300 = pneg %p185
        %p301 = pneg %p182
        %p302 = scmp.lt.s32.totalorder %s24, 1
        %s303 = scalar_select %p302, %s24, 1
        %p304 = scmp.lt.s32.totalorder %s25, 0
        %s305 = scalar_select %p304, %s25, 0
        %s306 = sadd.s32 %s305, %s303
        %s307 = smul.addr %s306, 4
        %s308 = scalar_lea.vmem %s4, %s307
        %s309 = sadd.s32 %s25, %s26
        %p310 = scmp.lt.s32.totalorder %s309, 0
        %s311 = scalar_select %p310, %s309, 0
        %s312 = smul.u32 2, %s311
        %s313 = sadd.s32 %s25, %s26
        %p314 = scmp.lt.s32.totalorder %s313, 0
        %s315 = scalar_select %p314, %s313, 0
        %s316 = smul.u32 2, %s315
        %p317 = scmp.lt.s32.totalorder %s24, 1
        %s318 = scalar_select %p317, %s24, 1
        %p319 = scmp.lt.s32.totalorder %s316, 1
        %s320 = scalar_select %p319, %s316, 1
        %s321 = smul.addr %s318, 2
        %s322 = sadd.s32 %s320, %s321
        %s323 = scalar_lea.vmem %s1, %s322
        %s324 = sadd.s32 %s25, %s26
        %p325 = scmp.lt.s32.totalorder %s324, 0
        %s326 = scalar_select %p325, %s324, 0
        %s327 = smul.u32 2, %s326
        %p328 = scmp.lt.s32.totalorder %s24, 1
        %s329 = scalar_select %p328, %s24, 1
        %p330 = scmp.lt.s32.totalorder %s25, 0
        %s331 = scalar_select %p330, %s25, 0
        %s332 = sadd.s32 %s331, %s329
        %s333 = smul.addr %s332, 4
        %s334 = scalar_lea.vmem %s2, %s333
        %p335 = scmp.lt.s32.totalorder %s24, 1
        %s336 = scalar_select %p335, %s24, 1
        %p337 = scmp.lt.s32.totalorder %s25, 0
        %s338 = scalar_select %p337, %s25, 0
        %s339 = sadd.s32 %s338, %s336
        %s340 = smul.addr %s339, 4
        %s341 = scalar_lea.vmem %s3, %s340
        %p342 = scmp.lt.s32.totalorder %s24, 1
        %s343 = scalar_select %p342, %s24, 1
        %p344 = scmp.lt.s32.totalorder %s25, 0
        %s345 = scalar_select %p344, %s25, 0
        %s346 = sadd.s32 %s345, %s343
        %s347 = smul.addr %s346, 4
        %s348 = scalar_lea.vmem %s4, %s347
        %p349 = scmp.eq.s32.totalorder %s26, 0
        // Predicated region
        $region33: #{tpu_custom_call.1} parent=27 // pred_check
          %p350 = pneg %p349
        $region34: #{tpu_custom_call.1} parent=27 // pred_check_branch
          %352 = sbr.rel (%p350) target = $region36
        $region35: #{tpu_custom_call.1} parent=27 // pred_region
          %vm353 = vcmask 3072
          %354 = vst.msk [vmem:[%s334] sm:$0xf] %vm353, 0
          %355 = vst.msk [vmem:[%s341] sm:$0xf] %vm353, 0
          %356 = vst.msk [vmem:[%s348] sm:$0xf] %vm353, 0
        $region36: #{tpu_custom_call.1} parent=27 // pred_fallthru
          _
        %v357 = vld [vmem:[%s257] sm:$0xff]
        %v358 = vld [vmem:[%s323] sm:$0x3]
        %v359 = vunpack.c.0.s8 %v358
        %v360 = vlaneseq
        %v361 = vshrl.u32 %v360, 7
        %v363 = vcombine.high %v357, %v357
        %vm365 = vcmask 1043456
        %v366 = vsel %vm365, %v357, -inf
        %v367 = vrot.slane %v366, 4
        %v368 = vmax.f32 %v366, %v367
        %v369 = vrot.slane %v368, 2
        %v370 = vmax.f32 %v368, %v369
        %v371 = vrot.slane %v370, 1
        %v372 = vmax.f32 %v370, %v371
        %v373 = vsel %vm365, %v363, -inf
        %v374 = vrot.slane %v373, 4
        %v375 = vmax.f32 %v373, %v374
        %v376 = vrot.slane %v375, 2
        %v377 = vmax.f32 %v375, %v376
        %v378 = vrot.slane %v377, 1
        %v379 = vmax.f32 %v377, %v378
        %v382 = vcombine.low %v372, %v379
        %vm384 = vcmp.eq.f32.partialorder %v357, %v382
        %v386 = vunpack.c.l.s4 839922192
        %v387 = vunpack.c.0.s8 %v386
        %v388 = vlaneseq
        %v389 = vshrl.u32 %v388, 7
        %v390 = vsub.s32 %v387, %v389
        %v391 = vrot.slane %v361, %v390
        %v392 = vsel %vm384, %v391, 4
        %v393 = vcombine.high %v392, %v392
        %v394 = vsel %vm365, %v392, 2147483647
        %v395 = vrot.slane %v394, 4
        %vm396 = vcmp.lt.s32.totalorder %v394, %v395
        %v397 = vsel %vm396, %v394, %v395
        %v398 = vrot.slane %v397, 2
        %vm399 = vcmp.lt.s32.totalorder %v397, %v398
        %v400 = vsel %vm399, %v397, %v398
        %v401 = vrot.slane %v400, 1
        %vm402 = vcmp.lt.s32.totalorder %v400, %v401
        %v403 = vsel %vm402, %v400, %v401
        %v404 = vsel %vm365, %v393, 2147483647
        %v405 = vrot.slane %v404, 4
        %vm406 = vcmp.lt.s32.totalorder %v404, %v405
        %v407 = vsel %vm406, %v404, %v405
        %v408 = vrot.slane %v407, 2
        %vm409 = vcmp.lt.s32.totalorder %v407, %v408
        %v410 = vsel %vm409, %v407, %v408
        %v411 = vrot.slane %v410, 1
        %vm412 = vcmp.lt.s32.totalorder %v410, %v411
        %v413 = vsel %vm412, %v410, %v411
        %v414 = vlaneseq
        %v415 = vshrl.u32 %v414, 7
        %v416 = vsub.s32 0, %v415
        %v417 = vrot.slane %v359, %v416
        %v418 = vlaneseq
        %v419 = vshrl.u32 %v418, 7
        %v420 = vsub.s32 4, %v419
        %v421 = vrot.slane %v359, %v420
        %v422 = vlaneseq
        %v423 = vshrl.u32 %v422, 7
        %v424 = vsub.s32 0, %v423
        %v425 = vrot.slane %v417, %v424
        %v426 = vlaneseq
        %v427 = vshrl.u32 %v426, 7
        %v428 = vsub.s32 0, %v427
        %v429 = vrot.slane %v421, %v428
        %vm430 = vcmp.eq.s32.totalorder %v361, %v425
        %vm431 = vcmp.eq.s32.totalorder %v361, %v429
        %vm432 = vcmp.eq.s32.totalorder %v361, %v403
        %vm433 = vcmp.eq.s32.totalorder %v361, %v413
        %vm434 = vcmp.eq.s32.totalorder %v403, %v417
        %vm435 = vcmp.eq.s32.totalorder %v413, %v421
        %v436 = vld [vmem:[%s334] sm:$0xf]
        %v437 = vsel %vm434, 1, 0
        %v438 = vsel %vm435, 1, 0
        %v439 = vlaneseq
        %v440 = vshrl.u32 %v439, 7
        %v441 = vsub.s32 0, %v440
        %v442 = vrot.slane %v437, %v441
        %v443 = vlaneseq
        %v444 = vshrl.u32 %v443, 7
        %v445 = vsub.s32 0, %v444
        %v446 = vrot.slane %v438, %v445
        %vm447 = vcmp.eq.s32.totalorder %v442, 1
        %vm448 = vcmp.eq.s32.totalorder %v446, 1
        %vm449 = vmand %vm430, %vm447
        %vm450 = vmand %vm431, %vm448
        %v451 = vsel %vm449, 1, 0
        %v452 = vsel %vm450, 1, 0
        %v453 = vsel %vm365, %v451, 0
        %v454 = vsel %vm365, %v452, 0
        %v455 = vadd.s32 %v453, %v454
        %v456 = vand.u32 %v455, 65535
        %v457 = vshrl.u32 %v455, 16
        %v458 = vcvt.s32.f32 %v456
        %v459 = vcvt.s32.f32 %v457
        %460 = vadd.xlane.f32.xlu0 %v458
        %v461 = vpop.xlane.xlu0 %460
        %462 = vadd.xlane.f32.xlu0 %v459
        %v463 = vpop.xlane.xlu0 %462
        %v464 = vcvt.f32.s32 %v461
        %v465 = vcvt.f32.s32 %v463
        %v466 = vshll.u32 %v465, 16
        %v467 = vadd.s32 %v466, %v464
        %v468 = vadd.s32 %v436, %v467
        %vm469 = vcmask 3072
        %470 = vst.msk [vmem:[%s334] sm:$0xf] %vm469, %v468
        %v471 = vld [vmem:[%s341] sm:$0xf]
        %v472 = vsel %vm432, 1, 0
        %v473 = vsel %vm433, 1, 0
        %v474 = vsel %vm365, %v472, 0
        %v475 = vsel %vm365, %v473, 0
        %v476 = vadd.s32 %v474, %v475
        %v477 = vand.u32 %v476, 65535
        %v478 = vshrl.u32 %v476, 16
        %v479 = vcvt.s32.f32 %v477
        %v480 = vcvt.s32.f32 %v478
        %481 = vadd.xlane.f32.xlu0 %v479
        %v482 = vpop.xlane.xlu0 %481
        %483 = vadd.xlane.f32.xlu0 %v480
        %v484 = vpop.xlane.xlu0 %483
        %v485 = vcvt.f32.s32 %v482
        %v486 = vcvt.f32.s32 %v484
        %v487 = vshll.u32 %v486, 16
        %v488 = vadd.s32 %v487, %v485
        %v489 = vadd.s32 %v471, %v488
        %490 = vst.msk [vmem:[%s341] sm:$0xf] %vm469, %v489
        %v491 = vld [vmem:[%s348] sm:$0xf]
        %v492 = vsel %vm430, 1, 0
        %v493 = vsel %vm431, 1, 0
        %v494 = vsel %vm365, %v492, 0
        %v495 = vsel %vm365, %v493, 0
        %v496 = vadd.s32 %v494, %v495
        %v497 = vand.u32 %v496, 65535
        %v498 = vshrl.u32 %v496, 16
        %v499 = vcvt.s32.f32 %v497
        %v500 = vcvt.s32.f32 %v498
        %501 = vadd.xlane.f32.xlu0 %v499
        %v502 = vpop.xlane.xlu0 %501
        %503 = vadd.xlane.f32.xlu0 %v500
        %v504 = vpop.xlane.xlu0 %503
        %v505 = vcvt.f32.s32 %v502
        %v506 = vcvt.f32.s32 %v504
        %v507 = vshll.u32 %v506, 16
        %v508 = vadd.s32 %v507, %v505
        %v509 = vadd.s32 %v491, %v508
        %510 = vst.msk [vmem:[%s348] sm:$0xf] %vm469, %v509
        %p511 = scmp.lt.s32.totalorder %s24, 1
        %s512 = scalar_select %p511, %s24, 1
        %p513 = scmp.lt.s32.totalorder %s25, 0
        %s514 = scalar_select %p513, %s25, 0
        %s515 = sadd.s32 %s514, %s512
        %s516 = smul.addr %s515, 4
        %s517 = scalar_lea.vmem %s2, %s516
        %p518 = scmp.lt.s32.totalorder %s24, 1
        %s519 = scalar_select %p518, %s24, 1
        %p520 = scmp.lt.s32.totalorder %s25, 0
        %s521 = scalar_select %p520, %s25, 0
        %s522 = sadd.s32 %s521, %s519
        %s523 = smul.addr %s522, 4
        %s524 = scalar_lea.vmem %s3, %s523
        %p525 = scmp.lt.s32.totalorder %s24, 1
        %s526 = scalar_select %p525, %s24, 1
        %p527 = scmp.lt.s32.totalorder %s25, 0
        %s528 = scalar_select %p527, %s25, 0
        %s529 = sadd.s32 %s528, %s526
        %s530 = smul.addr %s529, 4
        %s531 = scalar_lea.vmem %s4, %s530
        // Predicated region
        $region37: #{tpu_custom_call.1} parent=27 // pred_check
          %p532 = pneg %p126
        $region38: #{tpu_custom_call.1} parent=27 // pred_check_branch
          %534 = sbr.rel (%p532) target = $region40
        $region39: #{tpu_custom_call.1} parent=27 // pred_region
          _
        $region40: #{tpu_custom_call.1} parent=27 // pred_fallthru
          _
        // Predicated region
        $region41: #{tpu_custom_call.1} parent=27 // pred_check
          %p535 = pneg %p154
        $region42: #{tpu_custom_call.1} parent=27 // pred_check_branch
          %537 = sbr.rel (%p535) target = $region44
        $region43: #{tpu_custom_call.1} parent=27 // pred_region
          _
        $region44: #{tpu_custom_call.1} parent=27 // pred_fallthru
          _
        // Predicated region
        $region45: #{tpu_custom_call.1} parent=27 // pred_check
          %p538 = pneg %p182
        $region46: #{tpu_custom_call.1} parent=27 // pred_check_branch
          %540 = sbr.rel (%p538) target = $region48
        $region47: #{tpu_custom_call.1} parent=27 // pred_region
          _
        $region48: #{tpu_custom_call.1} parent=27 // pred_fallthru
          _
      $region28: #{tpu_custom_call.1} parent=5 // pred_fallthru
        _
      %p541 = scmp.le.s32.totalorder 2, %s14
      // Predicated region
      $region49: #{tpu_custom_call.1} parent=5 // pred_check
        %p542 = pneg %p541
      $region50: #{tpu_custom_call.1} parent=5 // pred_check_branch
        %544 = sbr.rel (%p542) target = $region52
      $region51: #{tpu_custom_call.1} parent=5 // pred_region
        %s545 = ssub.s32 %s14, 2
        // Predicated region
        $region53: #{tpu_custom_call.1} parent=51 // pred_check
          %p546 = pneg %p132
        $region54: #{tpu_custom_call.1} parent=51 // pred_check_branch
          %548 = sbr.rel (%p546) target = $region56
        $region55: #{tpu_custom_call.1} parent=51 // pred_region
          %p549 = scmp.lt.s32.totalorder %s27, 1
          %s550 = scalar_select %p549, %s27, 1
          %p551 = scmp.lt.s32.totalorder %s28, 0
          %s552 = scalar_select %p551, %s28, 0
          %s553 = sadd.s32 %s552, %s550
          %s554 = smul.addr %s553, 4
          %s555 = scalar_lea.vmem %s2, %s554
        $region56: #{tpu_custom_call.1} parent=51 // pred_fallthru
          _
        // Predicated region
        $region57: #{tpu_custom_call.1} parent=51 // pred_check
          %p556 = pneg %p160
        $region58: #{tpu_custom_call.1} parent=51 // pred_check_branch
          %558 = sbr.rel (%p556) target = $region60
        $region59: #{tpu_custom_call.1} parent=51 // pred_region
          %p559 = scmp.lt.s32.totalorder %s27, 1
          %s560 = scalar_select %p559, %s27, 1
          %p561 = scmp.lt.s32.totalorder %s28, 0
          %s562 = scalar_select %p561, %s28, 0
          %s563 = sadd.s32 %s562, %s560
          %s564 = smul.addr %s563, 4
          %s565 = scalar_lea.vmem %s3, %s564
        $region60: #{tpu_custom_call.1} parent=51 // pred_fallthru
          _
        // Predicated region
        $region61: #{tpu_custom_call.1} parent=51 // pred_check
          %p566 = pneg %p188
        $region62: #{tpu_custom_call.1} parent=51 // pred_check_branch
          %568 = sbr.rel (%p566) target = $region64
        $region63: #{tpu_custom_call.1} parent=51 // pred_region
          %p569 = scmp.lt.s32.totalorder %s27, 1
          %s570 = scalar_select %p569, %s27, 1
          %p571 = scmp.lt.s32.totalorder %s28, 0
          %s572 = scalar_select %p571, %s28, 0
          %s573 = sadd.s32 %s572, %s570
          %s574 = smul.addr %s573, 4
          %s575 = scalar_lea.vmem %s4, %s574
        $region64: #{tpu_custom_call.1} parent=51 // pred_fallthru
          _
      $region52: #{tpu_custom_call.1} parent=5 // pred_fallthru
        _
    $region6: #{tpu_custom_call.1} parent=1 // loop_footer
      %s18 = sadd.s32 1, %s14
    $region7: #{tpu_custom_call.1} parent=1 // loop_footer_branch
      %13 = sbr.rel target = $region3
    $region8: #{tpu_custom_call.1} parent=1 // loop_exit
      _
    %576 = vsyncpa [#allocation3], 1
    %s577 = scalar_lea.sflag [#allocation3], 1
    %578 = vsyncpa %s577, 1

</llo_original>
